<compile_context>
chip_gen: v7x
topology: tpu7x:2x2x1
jax: 0.10.0
libtpu: 0.0.40
codegen_flags: <defaults>
</compile_context>

<pallas_src>
import jax
import jax.numpy as jnp
from jax.experimental import pallas as pl
from jax.experimental.pallas import tpu as pltpu


# ----------------------------------------------------------------------------
# Kernels
# ----------------------------------------------------------------------------
def _packed_kernel(x_ref, w_ref, o_ref):
    # x_ref: (tm, 128) packed atoms (apr atoms per row, nz lanes each)
    # w_ref: (128, apr) block-diagonal energies matrix
    # o_ref: (tm, apr)  per-atom energies
    x = x_ref[...].astype(jnp.float32)
    w = w_ref[...]
    acc = jnp.dot(x, w, preferred_element_type=jnp.float32)
    o_ref[...] = acc.astype(o_ref.dtype)


def _rowwise_kernel(x_ref, e_ref, o_ref):
    # Fallback (nz does not divide 128): x_ref (tm, nz), e_ref (1, nz), o_ref (tm, 1)
    x = x_ref[...].astype(jnp.float32)
    e = e_ref[...].astype(jnp.float32)
    o_ref[...] = jnp.sum(x * e, axis=-1, keepdims=True).astype(o_ref.dtype)


# ----------------------------------------------------------------------------
# Wrappers
# ----------------------------------------------------------------------------
def _packed_matvec(x, energies, block_rows, out_dtype):
    N, nz = x.shape
    apr = 128 // nz                       # atoms packed per 128-lane row

    # Pad N up to a multiple of apr so the lane-packing reshape is exact.
    n_pad = (-N) % apr
    if n_pad:
        x = jnp.pad(x, ((0, n_pad), (0, 0)))
    P = (N + n_pad) // apr
    x_packed = x.reshape(P, 128)          # pure metadata reshape when n_pad == 0

    # Block-diagonal energies matrix: w[l, g] = energies[l % nz] if l // nz == g.
    lanes = jnp.arange(128)
    e_tiled = jnp.tile(energies.astype(jnp.float32), apr)             # (128,)
    w = jnp.where((lanes[:, None] // nz) == jnp.arange(apr)[None, :],
                  e_tiled[:, None], jnp.float32(0.0))                 # (128, apr)

    # Tile over packed rows: full array if small, else a multiple-of-8 block.
    if P <= block_rows:
        tm = P
    else:
        tm = max(8, (block_rows // 8) * 8)

    out2d = pl.pallas_call(
        _packed_kernel,
        out_shape=jax.ShapeDtypeStruct((P, apr), out_dtype),
        grid=(pl.cdiv(P, tm),),
        in_specs=[
            pl.BlockSpec((tm, 128), lambda i: (i, 0)),    # streamed atom tiles
            pl.BlockSpec((128, apr), lambda i: (0, 0)),   # energies matrix, resident
        ],
        out_specs=pl.BlockSpec((tm, apr), lambda i: (i, 0)),
        compiler_params=pltpu.CompilerParams(
            dimension_semantics=("parallel",),            # megacore-shardable on v7x
        ),
    )(x_packed, w)

    return out2d.reshape(P * apr)[:N]


def _rowwise_matvec(x, energies, block_rows, out_dtype):
    N, nz = x.shape
    e_row = energies.astype(jnp.float32).reshape(1, nz)

    if N <= block_rows:
        tm = N
    else:
        tm = max(8, (block_rows // 8) * 8)

    out2d = pl.pallas_call(
        _rowwise_kernel,
        out_shape=jax.ShapeDtypeStruct((N, 1), out_dtype),
        grid=(pl.cdiv(N, tm),),
        in_specs=[
            pl.BlockSpec((tm, nz), lambda i: (i, 0)),
            pl.BlockSpec((1, nz), lambda i: (0, 0)),
        ],
        out_specs=pl.BlockSpec((tm, 1), lambda i: (i, 0)),
        compiler_params=pltpu.CompilerParams(
            dimension_semantics=("parallel",),
        ),
    )(x, e_row)
    return out2d.reshape(N)


def atomic_energies_block(x: jax.Array, atomic_energies: jax.Array,
                          *, block_rows: int = 1024) -> jax.Array:
    """Pallas equivalent of AtomicEnergiesBlock.forward: matmul(x, atomic_energies).

    x:               [..., nz]
    atomic_energies: [nz]
    returns:         [...]
    """
    *lead, nz = x.shape
    assert atomic_energies.shape == (nz,)
    out_dtype = jnp.result_type(x.dtype, atomic_energies.dtype)

    x2 = x.reshape(-1, nz)
    if nz <= 128 and 128 % nz == 0:
        out_flat = _packed_matvec(x2, atomic_energies, block_rows, out_dtype)
    else:
        # nz does not divide 128: fall back to a (still large-tile) row-wise kernel.
        out_flat = _rowwise_matvec(x2, atomic_energies, block_rows, out_dtype)
    return out_flat.reshape(tuple(lead))


# ----------------------------------------------------------------------------
# Demo / correctness check
# ----------------------------------------------------------------------------
if __name__ == "__main__":
    key = jax.random.PRNGKey(0)
    k_e, k_idx, k_e2, k_idx2 = jax.random.split(key, 4)

    # --- Packed fast path: nz divides 128, N not a multiple of 128//nz (tests padding).
    nz, N = 8, 157
    atomic_energies = jax.random.normal(k_e, (nz,), dtype=jnp.float32)
    species = jax.random.randint(k_idx, (N,), 0, nz)
    x = jax.nn.one_hot(species, nz, dtype=jnp.float32)        # (N, nz)
    ref = x @ atomic_energies

    # Small block_rows here just to exercise a multi-step grid + partial edge block.
    out_small_blocks = atomic_energies_block(x, atomic_energies, block_rows=8)
    jax.block_until_ready(out_small_blocks)
    assert out_small_blocks.shape == (N,)
    assert jnp.allclose(out_small_blocks, ref, atol=1e-5, rtol=1e-5)

    # Default (large-tile) configuration.
    out_default = atomic_energies_block(x, atomic_energies)
    jax.block_until_ready(out_default)
    assert jnp.allclose(out_default, ref, atol=1e-5, rtol=1e-5)

    # Leading batch dims, as torch.matmul(x, e) supports [..., nz].
    x3 = x[:156].reshape(4, 39, nz)
    out3 = atomic_energies_block(x3, atomic_energies)
    jax.block_until_ready(out3)
    assert out3.shape == (4, 39)
    assert jnp.allclose(out3, (x3 @ atomic_energies), atol=1e-5, rtol=1e-5)

    # --- Fallback path: nz does not divide 128.
    nz2, N2 = 5, 23
    e2 = jax.random.normal(k_e2, (nz2,), dtype=jnp.float32)
    sp2 = jax.random.randint(k_idx2, (N2,), 0, nz2)
    x2 = jax.nn.one_hot(sp2, nz2, dtype=jnp.float32)
    out2 = atomic_energies_block(x2, e2)
    jax.block_until_ready(out2)
    assert out2.shape == (N2,)
    assert jnp.allclose(out2, x2 @ e2, atol=1e-5, rtol=1e-5)

    print("KERNEL_OK")
</pallas_src>

<mosaic_0001>
module attributes {stable_mosaic.version = 11 : i64} {
  func.func @_packed_kernel(%arg0: i32, %arg1: memref<8x128xf32, #tpu.memory_space<vmem>>, %arg2: memref<128x16xf32, #tpu.memory_space<vmem>>, %arg3: memref<8x16xf32, #tpu.memory_space<vmem>>) attributes {dimension_semantics = [#tpu.dimension_semantics<parallel>], iteration_bounds = array<i64: 2>, scalar_prefetch = 0 : i64, scratch_operands = 0 : i64, tpu.core_type = #tpu.core_type<tc>, window_params = [{transform_indices = @transform_0, window_bounds = array<i64: 8, 128>}, {pipeline_mode = #tpu.pipeline_mode<synchronous>, transform_indices = @transform_1, window_bounds = array<i64: 128, 16>}, {transform_indices = @transform_2, window_bounds = array<i64: 8, 16>}]} {
    %c0 = arith.constant 0 : index
    %c0_0 = arith.constant 0 : index
    %0 = vector.load %arg1[%c0, %c0_0] : memref<8x128xf32, #tpu.memory_space<vmem>>, vector<8x128xf32>
    %c0_1 = arith.constant 0 : index
    %c0_2 = arith.constant 0 : index
    %1 = vector.load %arg2[%c0_1, %c0_2] : memref<128x16xf32, #tpu.memory_space<vmem>>, vector<128x16xf32>
    %cst = arith.constant dense<0.000000e+00> : vector<8x16xf32>
    %2 = tpu.matmul %0, %1, %cst {dimension_numbers = #tpu.dot_dimension_numbers<[1], [0], [0], [1], [0, 0, 1, 1], [], []>} : vector<8x128xf32>, vector<128x16xf32>, vector<8x16xf32> -> vector<8x16xf32>
    %c0_3 = arith.constant 0 : index
    %c0_4 = arith.constant 0 : index
    %3 = vector.load %arg3[%c0_3, %c0_4] : memref<8x16xf32, #tpu.memory_space<vmem>>, vector<8x16xf32>
    tpu.vector_store %arg3[%c0_3, %c0_4], %2 {strides = array<i32>} : memref<8x16xf32, #tpu.memory_space<vmem>>, vector<8x16xf32>,
    return
  }
  func.func @transform_0(%arg0: i32) -> (i32, i32) {
    %c0_i32 = arith.constant 0 : i32
    %c0_i32_0 = arith.constant 0 : i32
    return %arg0, %c0_i32 : i32, i32
  }
  func.func @transform_1(%arg0: i32) -> (i32, i32) {
    %c0_i32 = arith.constant 0 : i32
    %c0_i32_0 = arith.constant 0 : i32
    %c0_i32_1 = arith.constant 0 : i32
    return %c0_i32, %c0_i32_0 : i32, i32
  }
  func.func @transform_2(%arg0: i32) -> (i32, i32) {
    %c0_i32 = arith.constant 0 : i32
    %c0_i32_0 = arith.constant 0 : i32
    return %arg0, %c0_i32 : i32, i32
  }
}

</mosaic_0001>

<llo_original>
// kernel: tpu_custom_call.1
$region0: #{tpu_custom_call.1}
  #allocation0 [shape = 'u32[]', space=smem, size = 0x4, offset = 0x4, fixed_abs, tag = 'smem constant byte address 0x4 - core index']
  #allocation1 [shape = 'u32[144,128]{1,0:T(1,128)}', space=vmem, size = 0x12000, scoped, tag = 'internal scratch']
  %s0 = inlined_call_operand.vmem [shape: f32[10,128], index: 0, kind: input, shape index: {}]
  %s1 = inlined_call_operand.vmem [shape: f32[128,16], index: 1, kind: input, shape index: {}]
  %s2 = inlined_call_operand.hbm [shape: f32[10,16], index: 2, kind: output, shape index: {}]
  %s3 = sld [smem:[#allocation0]]
  $region41: #{tpu_custom_call.1} parent=0
    _
  %s5 = ssub.s32 1, %s3
  %s6 = scalar_select 0, %s5, %s3
  $region1: #{tpu_custom_call.1} parent=0
    #allocation2 [shape = 'u8[8192]{0}', space=vmem, size = 0x2000, scoped, tag = 'output window, operand 0']
    #allocation3 [shape = 's32[2]{0}', space=sflag, size = 0x8, scoped, tag = 'scoped memory for tpu_custom_call.1']
    %7 = vsyncpa [#allocation3], 0
    %s8 = scalar_lea.sflag [#allocation3], 1
    %9 = vsyncpa %s8, 0
    loop: start=0, step=1, limit=4
    $region2: #{tpu_custom_call.1} parent=1 // loop_pre_header
      _
    $region3: #{tpu_custom_call.1} parent=1 // loop_header
      %s11 = sphi 0, %s15
      %p12 = scmp.ge.s32.totalorder %s11, 4
      %s21 = sphi 0, %s23
      %s24 = sphi 0, %s21
      %s25 = sphi 0, %s24
      %s41 = sphi 0, %s25
      %s45 = sphi 0, %s45
      %s47 = sphi 0, %s45
      %s48 = sphi 0, %s47
      %s62 = sphi 0, %s48
      %s68 = sphi 0, %s70
      %s71 = sphi 0, %s68
      %s72 = sphi 0, %s71
      %s88 = sphi 0, %s72
    $region4: #{tpu_custom_call.1} parent=1 // loop_header_branch
      %14 = sbr.rel (%p12) target = $region8
    $region5: #{tpu_custom_call.1} parent=1 // loop_body
      %s16 = ssub.s32 %s11, 1
      %s17 = ssub.s32 %s11, 2
      %s18 = sadd.s32 %s11, 1
      %s19 = ssub.s32 %s11, %s18
      %p20 = scmp.eq.s32.totalorder %s19, 0
      %s22 = sadd.s32 %s21, 1
      %s23 = scalar_select %p20, %s21, %s22
      %p26 = pneg %p20
      %p27 = scmp.eq.s32.totalorder %s11, 1
      %p28 = por %p26, %p27
      %p29 = scmp.ne.s32.totalorder %s21, %s24
      %p30 = scmp.eq.s32.totalorder %s11, 0
      %p31 = por %p29, %p30
      %p32 = scmp.ne.s32.totalorder %s21, %s24
      %p33 = scmp.eq.s32.totalorder %s16, 1
      %p34 = por %p32, %p33
      %p35 = scmp.ne.s32.totalorder %s24, %s25
      %p36 = scmp.eq.s32.totalorder %s16, 0
      %p37 = por %p35, %p36
      %p38 = scmp.ne.s32.totalorder %s24, %s25
      %p39 = scmp.eq.s32.totalorder %s17, 1
      %p40 = por %p38, %p39
      %p42 = scmp.ne.s32.totalorder %s25, %s41
      %p43 = scmp.eq.s32.totalorder %s17, 0
      %p44 = por %p42, %p43
      %s46 = sadd.s32 %s45, 1
      %p49 = scmp.eq.s32.totalorder %s11, 1
      %p50 = scmp.ne.s32.totalorder %s45, %s47
      %p51 = scmp.eq.s32.totalorder %s11, 0
      %p52 = por %p50, %p51
      %p53 = scmp.ne.s32.totalorder %s45, %s47
      %p54 = scmp.eq.s32.totalorder %s16, 1
      %p55 = por %p53, %p54
      %p56 = scmp.ne.s32.totalorder %s47, %s48
      %p57 = scmp.eq.s32.totalorder %s16, 0
      %p58 = por %p56, %p57
      %p59 = scmp.ne.s32.totalorder %s47, %s48
      %p60 = scmp.eq.s32.totalorder %s17, 1
      %p61 = por %p59, %p60
      %p63 = scmp.ne.s32.totalorder %s48, %s62
      %p64 = scmp.eq.s32.totalorder %s17, 0
      %p65 = por %p63, %p64
      %s66 = ssub.s32 %s11, %s18
      %p67 = scmp.eq.s32.totalorder %s66, 0
      %s69 = sadd.s32 %s68, 1
      %s70 = scalar_select %p67, %s68, %s69
      %p73 = pneg %p67
      %p74 = scmp.eq.s32.totalorder %s11, 1
      %p75 = por %p73, %p74
      %p76 = scmp.ne.s32.totalorder %s68, %s71
      %p77 = scmp.eq.s32.totalorder %s11, 0
      %p78 = por %p76, %p77
      %p79 = scmp.ne.s32.totalorder %s68, %s71
      %p80 = scmp.eq.s32.totalorder %s16, 1
      %p81 = por %p79, %p80
      %p82 = scmp.ne.s32.totalorder %s71, %s72
      %p83 = scmp.eq.s32.totalorder %s16, 0
      %p84 = por %p82, %p83
      %p85 = scmp.ne.s32.totalorder %s71, %s72
      %p86 = scmp.eq.s32.totalorder %s17, 1
      %p87 = por %p85, %p86
      %p89 = scmp.ne.s32.totalorder %s72, %s88
      %p90 = scmp.eq.s32.totalorder %s17, 0
      %p91 = por %p89, %p90
      %p92 = scmp.le.s32.totalorder 1, %s11
      %p93 = scmp.lt.s32.totalorder %s11, 3
      %p94 = pnand %p92, %p93
      %p95 = pneg %p94
      // Predicated region
      $region9: #{tpu_custom_call.1} parent=5 // pred_check
        _
      $region10: #{tpu_custom_call.1} parent=5 // pred_check_branch
        %97 = sbr.rel (%p94) target = $region12
      $region11: #{tpu_custom_call.1} parent=5 // pred_region
        %s98 = ssub.s32 %s11, 1
        // Predicated region
        $region13: #{tpu_custom_call.1} parent=11 // pred_check
          %p99 = pneg %p58
        $region14: #{tpu_custom_call.1} parent=11 // pred_check_branch
          %101 = sbr.rel (%p99) target = $region16
        $region15: #{tpu_custom_call.1} parent=11 // pred_region
          _
        $region16: #{tpu_custom_call.1} parent=11 // pred_fallthru
          _
      $region12: #{tpu_custom_call.1} parent=5 // pred_fallthru
        _
      %p102 = scmp.lt.s32.totalorder %s11, 2
      // Predicated region
      $region17: #{tpu_custom_call.1} parent=5 // pred_check
        %p103 = pneg %p102
      $region18: #{tpu_custom_call.1} parent=5 // pred_check_branch
        %105 = sbr.rel (%p103) target = $region20
      $region19: #{tpu_custom_call.1} parent=5 // pred_region
        // Predicated region
        $region21: #{tpu_custom_call.1} parent=19 // pred_check
          %p106 = pneg %p31
        $region22: #{tpu_custom_call.1} parent=19 // pred_check_branch
          %108 = sbr.rel (%p106) target = $region24
        $region23: #{tpu_custom_call.1} parent=19 // pred_region
          %p109 = scmp.lt.s32.totalorder %s11, 1
          %s110 = scalar_select %p109, %s11, 1
          %s111 = smul.addr %s110, 8
          %s112 = scalar_lea.vmem %s0, %s111
        $region24: #{tpu_custom_call.1} parent=19 // pred_fallthru
          _
      $region20: #{tpu_custom_call.1} parent=5 // pred_fallthru
        _
      %p113 = scmp.le.s32.totalorder 1, %s11
      %p114 = scmp.lt.s32.totalorder %s11, 3
      %p115 = pnand %p113, %p114
      %p116 = pneg %p115
      // Predicated region
      $region25: #{tpu_custom_call.1} parent=5 // pred_check
        _
      $region26: #{tpu_custom_call.1} parent=5 // pred_check_branch
        %118 = sbr.rel (%p115) target = $region28
      $region27: #{tpu_custom_call.1} parent=5 // pred_region
        %s119 = ssub.s32 %s11, 1
        %p120 = scmp.lt.s32.totalorder %s16, 1
        %s121 = scalar_select %p120, %s16, 1
        %s122 = smul.addr %s121, 8
        %s123 = scalar_lea.vmem %s0, %s122
        %p124 = pneg %p37
        %p125 = pneg %p34
        %p126 = pneg %p58
        %p127 = pneg %p55
        %p128 = pneg %p84
        %p129 = pneg %p81
        %s130 = sand.u32 %s71, 1
        %s131 = scalar_lea.sflag [#allocation3], %s130
        %s132 = sand.u32 %s71, 1
        %s133 = smul.addr %s132, 8
        %s134 = scalar_lea.vmem [#allocation2], %s133
        %p135 = scmp.lt.s32.totalorder %s16, 1
        %s136 = scalar_select %p135, %s16, 1
        %s137 = smul.addr %s136, 8
        %s138 = scalar_lea.vmem %s0, %s137
        %v139 = vld [vmem:[%s138] sm:$0xff]
        %v140 = vld [vmem:[%s1] sm:$0xff]
        %v141 = vld [vmem:[%s1 + $0x8] sm:$0xff]
        %v142 = vld [vmem:[%s1 + $0x10] sm:$0xff]
        %v143 = vld [vmem:[%s1 + $0x18] sm:$0xff]
        %v144 = vld [vmem:[%s1 + $0x20] sm:$0xff]
        %v145 = vld [vmem:[%s1 + $0x28] sm:$0xff]
        %v146 = vld [vmem:[%s1 + $0x30] sm:$0xff]
        %v147 = vld [vmem:[%s1 + $0x38] sm:$0xff]
        %v148 = vld [vmem:[%s1 + $0x40] sm:$0xff]
        %v149 = vld [vmem:[%s1 + $0x48] sm:$0xff]
        %v150 = vld [vmem:[%s1 + $0x50] sm:$0xff]
        %v151 = vld [vmem:[%s1 + $0x58] sm:$0xff]
        %v152 = vld [vmem:[%s1 + $0x60] sm:$0xff]
        %v153 = vld [vmem:[%s1 + $0x68] sm:$0xff]
        %v154 = vld [vmem:[%s1 + $0x70] sm:$0xff]
        %v155 = vld [vmem:[%s1 + $0x78] sm:$0xff]
        %156 = vmatprep.subr.mxu0 0.0
        %157 = vmatpush1.msra.mxu0 %v140
        %158 = vmatprep.subr.mxu0 0.0
        %159 = vmatpush1.msra.mxu0 %v141
        %160 = vmatprep.subr.mxu0 0.0
        %161 = vmatpush1.msra.mxu0 %v142
        %162 = vmatprep.subr.mxu0 0.0
        %163 = vmatpush1.msra.mxu0 %v143
        %164 = vmatprep.subr.mxu0 0.0
        %165 = vmatpush1.msra.mxu0 %v144
        %166 = vmatprep.subr.mxu0 0.0
        %167 = vmatpush1.msra.mxu0 %v145
        %168 = vmatprep.subr.mxu0 0.0
        %169 = vmatpush1.msra.mxu0 %v146
        %170 = vmatprep.subr.mxu0 0.0
        %171 = vmatpush1.msra.mxu0 %v147
        %172 = vmatprep.subr.mxu0 0.0
        %173 = vmatpush1.msra.mxu0 %v148
        %174 = vmatprep.subr.mxu0 0.0
        %175 = vmatpush1.msra.mxu0 %v149
        %176 = vmatprep.subr.mxu0 0.0
        %177 = vmatpush1.msra.mxu0 %v150
        %178 = vmatprep.subr.mxu0 0.0
        %179 = vmatpush1.msra.mxu0 %v151
        %180 = vmatprep.subr.mxu0 0.0
        %181 = vmatpush1.msra.mxu0 %v152
        %182 = vmatprep.subr.mxu0 0.0
        %183 = vmatpush1.msra.mxu0 %v153
        %184 = vmatprep.subr.mxu0 0.0
        %185 = vmatpush1.msra.mxu0 %v154
        %186 = vmatprep.subr.mxu0 0.0
        %187 = vmatpush1.msra.mxu0 %v155
        %188 = vmatprep.subr.mxu0 0.0
        %189 = vmatpush1.msra.mxu0 0.0
        %190 = vmatprep.subr.mxu0 0.0
        %191 = vmatpush1.msra.mxu0 0.0
        %192 = vmatprep.subr.mxu0 0.0
        %193 = vmatpush1.msra.mxu0 0.0
        %194 = vmatprep.subr.mxu0 0.0
        %195 = vmatpush1.msra.mxu0 0.0
        %196 = vmatprep.subr.mxu0 0.0
        %197 = vmatpush1.msra.mxu0 0.0
        %198 = vmatprep.subr.mxu0 0.0
        %199 = vmatpush1.msra.mxu0 0.0
        %200 = vmatprep.subr.mxu0 0.0
        %201 = vmatpush1.msra.mxu0 0.0
        %202 = vmatprep.subr.mxu0 0.0
        %203 = vmatpush1.msra.mxu0 0.0
        %204 = vmatprep.subr.mxu0 0.0
        %205 = vmatpush1.msra.mxu0 0.0
        %206 = vmatprep.subr.mxu0 0.0
        %207 = vmatpush1.msra.mxu0 0.0
        %208 = vmatprep.subr.mxu0 0.0
        %209 = vmatpush1.msra.mxu0 0.0
        %210 = vmatprep.subr.mxu0 0.0
        %211 = vmatpush1.msra.mxu0 0.0
        %212 = vmatprep.subr.mxu0 0.0
        %213 = vmatpush1.msra.mxu0 0.0
        %214 = vmatprep.subr.mxu0 0.0
        %215 = vmatpush1.msra.mxu0 0.0
        %216 = vmatprep.subr.mxu0 0.0
        %217 = vmatpush1.msra.mxu0 0.0
        %218 = vmatprep.subr.mxu0 0.0
        %219 = vmatpush1.msra.mxu0 0.0
        %220 = vmatprep.mubr.f32.mxu0 0.0
        %221 = vmatmul.mubr.f32.gmra.mrb[0].mxu0 %v139
        %v222 = vpop.f32.mrb[0].mxu0
        %v223 = vadd.f32 0.0, %v222
        %v224 = vpop.f32.mrb[0].mxu0
        %225 = vdwg.mxu0
        %vm226 = vcmask 130048
        %227 = vst.msk [vmem:[%s134] sm:$0xff] %vm226, %v223
        %s228 = sand.u32 %s71, 1
        %s229 = scalar_lea.sflag [#allocation3], %s228
        %s230 = sand.u32 %s71, 1
        %s231 = smul.addr %s230, 8
        %s232 = scalar_lea.vmem [#allocation2], %s231
        // Predicated region
        $region29: #{tpu_custom_call.1} parent=27 // pred_check
          %p233 = pneg %p81
        $region30: #{tpu_custom_call.1} parent=27 // pred_check_branch
          %235 = sbr.rel (%p233) target = $region32
        $region31: #{tpu_custom_call.1} parent=27 // pred_region
          %s237 = ssub.s32 128, 128
          %238 = vsyncadd %s229, %s237
          %s239 = smul.addr %s16, 128
          %s240 = scalar_lea.hbm %s2, %s239
          %s242 = sshll.u32 %s232, 4
          %s243 = int_to_ptr.vmem [resolvable:$true] %s242
          %245 = dma.vmem_to_hbm [thread:$0]  %s243, 128, %s240, %s229
        $region32: #{tpu_custom_call.1} parent=27 // pred_fallthru
          _
      $region28: #{tpu_custom_call.1} parent=5 // pred_fallthru
        _
      %p246 = scmp.le.s32.totalorder 2, %s11
      // Predicated region
      $region33: #{tpu_custom_call.1} parent=5 // pred_check
        %p247 = pneg %p246
      $region34: #{tpu_custom_call.1} parent=5 // pred_check_branch
        %249 = sbr.rel (%p247) target = $region36
      $region35: #{tpu_custom_call.1} parent=5 // pred_region
        %s250 = ssub.s32 %s11, 2
        // Predicated region
        $region37: #{tpu_custom_call.1} parent=35 // pred_check
          %p251 = pneg %p87
        $region38: #{tpu_custom_call.1} parent=35 // pred_check_branch
          %253 = sbr.rel (%p251) target = $region40
        $region39: #{tpu_custom_call.1} parent=35 // pred_region
          %s254 = sand.u32 %s72, 1
          %s255 = scalar_lea.sflag [#allocation3], %s254
          %s256 = sand.u32 %s72, 1
          %s257 = smul.addr %s256, 8
          %s258 = scalar_lea.vmem [#allocation2], %s257
          %259 = dma.done %s255, 128
        $region40: #{tpu_custom_call.1} parent=35 // pred_fallthru
          _
      $region36: #{tpu_custom_call.1} parent=5 // pred_fallthru
        _
    $region6: #{tpu_custom_call.1} parent=1 // loop_footer
      %s15 = sadd.s32 1, %s11
    $region7: #{tpu_custom_call.1} parent=1 // loop_footer_branch
      %10 = sbr.rel target = $region3
    $region8: #{tpu_custom_call.1} parent=1 // loop_exit
      _
    %260 = vsyncpa [#allocation3], 1
    %s261 = scalar_lea.sflag [#allocation3], 1
    %262 = vsyncpa %s261, 1

</llo_original>
